<compile_context>
chip_gen: v7x
topology: tpu7x:2x2x1
jax: 0.10.0
libtpu: 0.0.40
codegen_flags: <defaults>
</compile_context>

<pallas_src>
import functools

import jax
import jax.numpy as jnp
from jax.experimental import pallas as pl
from jax.experimental.pallas import tpu as pltpu

_TARGET_TILE_BYTES = 8 * 1024 * 1024   # ~8 MiB per pipelined buffer
_MIN_GRID_STEPS = 4                    # keep >=4 grid steps for megacore sharding
_VMEM_LIMIT_BYTES = 48 * 1024 * 1024   # <= v7x 64 MiB physical, > v5e 16 MiB default

# bf16 VPU/EUP are native on v6e/v7x; older generations emulate bf16, so keep
# the f32-compute path there.  Backend probe happens once at import time.
try:
    _DEVICE_KIND = jax.devices()[0].device_kind.lower()
except Exception:  # conservative fallback: always compute in f32
    _DEVICE_KIND = ""
_BF16_NATIVE = any(tag in _DEVICE_KIND for tag in ("v6", "v7", "7x"))


def _swish_kernel(x_ref, o_ref, *, compute_dtype):
    # x_ref / o_ref: (tm, lanes) tile of the lane-dense 2-D view of the input.
    x = x_ref[...].astype(compute_dtype)          # no-op when dtypes already match
    o_ref[...] = (x * jax.nn.sigmoid(x)).astype(o_ref.dtype)


def _round_up(x, m):
    return ((x + m - 1) // m) * m


def _pick_lanes(n):
    """Largest lane width (multiple of 128) that divides n exactly, else None."""
    for lanes in (1024, 512, 256, 128):
        if n % lanes == 0:
            return lanes
    return None


def _swish_2d(xm):
    rows, lanes = xm.shape
    itemsize = jnp.dtype(xm.dtype).itemsize

    # ~8 MiB per buffer, 8-sublane aligned.
    target_tm = max(8, (_TARGET_TILE_BYTES // (lanes * itemsize)) // 8 * 8)
    # Cap the tile so the grid has >= _MIN_GRID_STEPS steps (megacore sharding
    # on v7x) and never exceeds the (sublane-rounded) row count.
    tm_cap = _round_up(pl.cdiv(rows, _MIN_GRID_STEPS), 8)
    tm = max(8, min(target_tm, tm_cap, _round_up(rows, 8)))

    if xm.dtype == jnp.bfloat16 and _BF16_NATIVE:
        compute_dtype = jnp.bfloat16          # native bf16 VPU/EUP on v6e/v7x
    else:
        compute_dtype = jnp.float32           # f32 epilogue (v5e-safe; no-op for f32)

    grid = (pl.cdiv(rows, tm),)               # partial boundary block is masked
    return pl.pallas_call(
        functools.partial(_swish_kernel, compute_dtype=compute_dtype),
        out_shape=jax.ShapeDtypeStruct((rows, lanes), xm.dtype),
        grid_spec=pl.GridSpec(
            grid=grid,
            in_specs=[pl.BlockSpec((tm, lanes), lambda i: (i, 0))],
            out_specs=pl.BlockSpec((tm, lanes), lambda i: (i, 0)),
        ),
        compiler_params=pltpu.CompilerParams(
            dimension_semantics=("parallel",),        # megacore sharding on v7x
            vmem_limit_bytes=_VMEM_LIMIT_BYTES,
        ),
    )(xm)


@jax.jit
def swish(x):
    """Elementwise Swish / SiLU: x * sigmoid(x). Accepts any shape / float dtype."""
    orig_shape = x.shape
    n = x.size
    if n == 0:
        return x

    lanes = _pick_lanes(n)
    if lanes is not None:
        # Aligned fast path: free reshape, no padding, no output slice.
        out = _swish_2d(x.reshape(n // lanes, lanes))
        return out.reshape(orig_shape)

    # Ragged fallback (element count not a multiple of 128): pad the flat view
    # up to one lane-width row boundary and slice back.  swish(0) == 0 so zero
    # padding is harmless; this path pays an extra HBM round-trip for pad/slice.
    lanes = 512
    rows = pl.cdiv(n, lanes)
    flat = jnp.pad(x.reshape(-1), (0, rows * lanes - n))
    out = _swish_2d(flat.reshape(rows, lanes))
    return out.reshape(-1)[:n].reshape(orig_shape)


if __name__ == "__main__":
    key = jax.random.PRNGKey(0)
    k1, k2, k3 = jax.random.split(key, 3)

    # Shape consistent with how Swish is used inside the model: (B, T, hidden).
    B, T, hidden = 2, 8, 32
    x = jax.random.normal(k1, (B, T, hidden), dtype=jnp.float32)
    out = swish(x)
    jax.block_until_ready(out)
    ref = x * jax.nn.sigmoid(x)
    assert out.shape == x.shape
    assert jnp.allclose(out, ref, atol=1e-5, rtol=1e-5)

    # Ragged shape (element count not a multiple of 128) -> padded fallback path.
    x2 = jax.random.normal(k2, (3, 17, 129), dtype=jnp.float32)
    out2 = swish(x2)
    jax.block_until_ready(out2)
    ref2 = x2 * jax.nn.sigmoid(x2)
    assert out2.shape == x2.shape
    assert jnp.allclose(out2, ref2, atol=1e-5, rtol=1e-5)

    # bf16 path (native bf16 compute on v6e/v7x, f32 epilogue elsewhere).
    x3 = jax.random.normal(k3, (2, 8, 256), dtype=jnp.bfloat16)
    out3 = swish(x3)
    jax.block_until_ready(out3)
    x3f = x3.astype(jnp.float32)
    ref3 = x3f * jax.nn.sigmoid(x3f)
    assert out3.dtype == jnp.bfloat16
    assert jnp.allclose(out3.astype(jnp.float32), ref3, atol=3e-2, rtol=3e-2)

    print("KERNEL_OK")
</pallas_src>

<mosaic_0001>
module attributes {stable_mosaic.version = 11 : i64} {
  func.func @_swish_kernel(%arg0: i32, %arg1: memref<8x512xf32, #tpu.memory_space<vmem>>, %arg2: memref<8x512xf32, #tpu.memory_space<vmem>>) attributes {dimension_semantics = [#tpu.dimension_semantics<parallel>], iteration_bounds = array<i64: 1>, scalar_prefetch = 0 : i64, scratch_operands = 0 : i64, tpu.core_type = #tpu.core_type<tc>, window_params = [{transform_indices = @transform_0, window_bounds = array<i64: 8, 512>}, {transform_indices = @transform_1, window_bounds = array<i64: 8, 512>}]} {
    %c0 = arith.constant 0 : index
    %c0_0 = arith.constant 0 : index
    %0 = vector.load %arg1[%c0, %c0_0] : memref<8x512xf32, #tpu.memory_space<vmem>>, vector<8x512xf32>
    %1 = arith.negf %0 : vector<8x512xf32>
    %2 = math.exp %1 : vector<8x512xf32>
    %cst = arith.constant 1.000000e+00 : f32
    %3 = vector.broadcast %cst : f32 to vector<8x512xf32>
    %4 = arith.addf %3, %2 : vector<8x512xf32>
    %5 = arith.divf %3, %4 : vector<8x512xf32>
    %6 = arith.mulf %0, %5 : vector<8x512xf32>
    %c0_1 = arith.constant 0 : index
    %c0_2 = arith.constant 0 : index
    %7 = vector.load %arg2[%c0_1, %c0_2] : memref<8x512xf32, #tpu.memory_space<vmem>>, vector<8x512xf32>
    tpu.vector_store %arg2[%c0_1, %c0_2], %6 {strides = array<i32>} : memref<8x512xf32, #tpu.memory_space<vmem>>, vector<8x512xf32>,
    return
  }
  func.func @transform_0(%arg0: i32) -> (i32, i32) {
    %c0_i32 = arith.constant 0 : i32
    %c0_i32_0 = arith.constant 0 : i32
    return %arg0, %c0_i32 : i32, i32
  }
  func.func @transform_1(%arg0: i32) -> (i32, i32) {
    %c0_i32 = arith.constant 0 : i32
    %c0_i32_0 = arith.constant 0 : i32
    return %arg0, %c0_i32 : i32, i32
  }
}

</mosaic_0001>

<llo_original>
// kernel: swish.1
$region0: #{swish.1}
  #allocation0 [shape = 'u32[]', space=smem, size = 0x4, offset = 0x4, fixed_abs, tag = 'smem constant byte address 0x4 - core index']
  #allocation1 [shape = 'u32[144,128]{1,0:T(1,128)}', space=vmem, size = 0x12000, scoped, tag = 'internal scratch']
  %s0 = inlined_call_operand.vmem [shape: f32[1,512], index: 0, kind: input, shape index: {}]
  %s1 = inlined_call_operand.vmem [shape: f32[1,512], index: 1, kind: output, shape index: {}]
  %s2 = sld [smem:[#allocation0]]
  $region44: #{swish.1} parent=0
    _
  %s4 = ssub.s32 1, %s2
  %s5 = scalar_select 0, %s4, %s2
  $region1: #{swish.1} parent=0
    #allocation2 [shape = 'u8[16384]{0}', space=vmem, size = 0x4000, scoped, tag = 'output window, operand 0, single buffered']
    // Predicated region
    $region2: #{swish.1} parent=1 // pred_check
      _
    $region3: #{swish.1} parent=1 // pred_check_branch
      %7 = sbr.rel (0) target = $region5
    $region4: #{swish.1} parent=1 // pred_region
      _
    $region5: #{swish.1} parent=1 // pred_fallthru
      _
    %v8 = vld [vmem:[%s0] sm:$0xf]
    %v9 = vld [vmem:[%s0 + $0x4] sm:$0xf]
    %v10 = vld [vmem:[%s0 + $0x8] sm:$0xf]
    %v11 = vld [vmem:[%s0 + $0xc] sm:$0xf]
    %v12 = vld [vmem:[%s0 + $0x10] sm:$0xf]
    %v13 = vld [vmem:[%s0 + $0x14] sm:$0xf]
    %v14 = vld [vmem:[%s0 + $0x18] sm:$0xf]
    %v15 = vld [vmem:[%s0 + $0x1c] sm:$0xf]
    %v16 = vxor.u32 %v8, 2147483648
    %v17 = vxor.u32 %v9, 2147483648
    %v18 = vxor.u32 %v10, 2147483648
    %v19 = vxor.u32 %v11, 2147483648
    %v20 = vxor.u32 %v12, 2147483648
    %v21 = vxor.u32 %v13, 2147483648
    %v22 = vxor.u32 %v14, 2147483648
    %v23 = vxor.u32 %v15, 2147483648
    %v24 = vmul.f32 %v16, 1.442695
    %v25 = vpow.pop %v24
    %v26 = vmul.f32 %v17, 1.442695
    %v27 = vpow.pop %v26
    %v28 = vmul.f32 %v18, 1.442695
    %v29 = vpow.pop %v28
    %v30 = vmul.f32 %v19, 1.442695
    %v31 = vpow.pop %v30
    %v32 = vmul.f32 %v20, 1.442695
    %v33 = vpow.pop %v32
    %v34 = vmul.f32 %v21, 1.442695
    %v35 = vpow.pop %v34
    %v36 = vmul.f32 %v22, 1.442695
    %v37 = vpow.pop %v36
    %v38 = vmul.f32 %v23, 1.442695
    %v39 = vpow.pop %v38
    %v40 = vadd.f32 %v25, 1.0
    %v41 = vadd.f32 %v27, 1.0
    %v42 = vadd.f32 %v29, 1.0
    %v43 = vadd.f32 %v31, 1.0
    %v44 = vadd.f32 %v33, 1.0
    %v45 = vadd.f32 %v35, 1.0
    %v46 = vadd.f32 %v37, 1.0
    %v47 = vadd.f32 %v39, 1.0
    %v48 = vrcp.pop %v40
    %v49 = vmul.f32 1.0, %v48
    %v50 = vrcp.pop %v41
    %v51 = vmul.f32 1.0, %v50
    %v52 = vrcp.pop %v42
    %v53 = vmul.f32 1.0, %v52
    %v54 = vrcp.pop %v43
    %v55 = vmul.f32 1.0, %v54
    %v56 = vrcp.pop %v44
    %v57 = vmul.f32 1.0, %v56
    %v58 = vrcp.pop %v45
    %v59 = vmul.f32 1.0, %v58
    %v60 = vrcp.pop %v46
    %v61 = vmul.f32 1.0, %v60
    %v62 = vrcp.pop %v47
    %v63 = vmul.f32 1.0, %v62
    %v64 = vmul.f32 %v8, %v49
    %v65 = vmul.f32 %v9, %v51
    %v66 = vmul.f32 %v10, %v53
    %v67 = vmul.f32 %v11, %v55
    %v68 = vmul.f32 %v12, %v57
    %v69 = vmul.f32 %v13, %v59
    %v70 = vmul.f32 %v14, %v61
    %v71 = vmul.f32 %v15, %v63
    %v72 = vlaneseq
    %vm73 = vcmp.ge.s32.totalorder %v72, 0
    %vm74 = vcmp.lt.s32.totalorder %v72, 512
    %vm75 = vmand %vm73, %vm74
    %76 = vst.msk [vmem:[#allocation2] sm:$0xf] %vm75, %v64
    %77 = vst.msk [vmem:[#allocation2 + $0x4] sm:$0xf] %vm75, %v65
    %78 = vst.msk [vmem:[#allocation2 + $0x8] sm:$0xf] %vm75, %v66
    %79 = vst.msk [vmem:[#allocation2 + $0xc] sm:$0xf] %vm75, %v67
    %80 = vst.msk [vmem:[#allocation2 + $0x10] sm:$0xf] %vm75, %v68
    %81 = vst.msk [vmem:[#allocation2 + $0x14] sm:$0xf] %vm75, %v69
    %82 = vst.msk [vmem:[#allocation2 + $0x18] sm:$0xf] %vm75, %v70
    %83 = vst.msk [vmem:[#allocation2 + $0x1c] sm:$0xf] %vm75, %v71
    // Predicated region
    $region6: #{swish.1} parent=1 // pred_check
      _
    $region7: #{swish.1} parent=1 // pred_check_branch
      %85 = sbr.rel (0) target = $region9
    $region8: #{swish.1} parent=1 // pred_region
      // Predicated region
      $region10: #{swish.1} parent=8 // pred_check
        _
      $region11: #{swish.1} parent=8 // pred_check_branch
        %87 = sbr.rel (0) target = $region13
      $region12: #{swish.1} parent=8 // pred_region
        // Predicated region
        $region14: #{swish.1} parent=12 // pred_check
          _
        $region15: #{swish.1} parent=12 // pred_check_branch
          %89 = sbr.rel target = $region17
        $region16: #{swish.1} parent=12 // pred_region
          // Predicated region
          $region29: #{swish.1} parent=16 // pred_check
            _
          $region30: #{swish.1} parent=16 // pred_check_branch
            %104 = sbr.rel (0) target = $region32
          $region31: #{swish.1} parent=16 // pred_region
            loop: start=0, step=1, limit=1
            $region33: #{swish.1} parent=31 // loop_pre_header
              _
            $region34: #{swish.1} parent=31 // loop_header
              %s107 = sphi 0, %s111
              %p108 = scmp.ge.s32.totalorder %s107, 1
              %s112 = sphi [#allocation2], [#allocation2]
              %s113 = sphi %s1, %s1
            $region35: #{swish.1} parent=31 // loop_header_branch
              %110 = sbr.rel (%p108) target = $region39
            $region36: #{swish.1} parent=31 // loop_body
              %v114 = vld [vmem:[%s112] sm:$0xf]
              %115 = vst [vmem:[%s113] sm:$0xf] %v114
            $region37: #{swish.1} parent=31 // loop_footer
              %s111 = sadd.s32 1, %s107
            $region38: #{swish.1} parent=31 // loop_footer_branch
              %106 = sbr.rel target = $region34
            $region39: #{swish.1} parent=31 // loop_exit
              _
          $region32: #{swish.1} parent=16 // pred_fallthru
            _
        $region17: #{swish.1} parent=12 // pred_fallthru
          _
        // Predicated region
        $region18: #{swish.1} parent=12 // pred_check
          _
        $region19: #{swish.1} parent=12 // pred_check_branch
          %91 = sbr.rel (0) target = $region21
        $region20: #{swish.1} parent=12 // pred_region
          loop: start=0, step=1, limit=1
          $region22: #{swish.1} parent=20 // loop_pre_header
            _
          $region23: #{swish.1} parent=20 // loop_header
            %s94 = sphi 0, %s98
            %p95 = scmp.ge.s32.totalorder %s94, 1
            %s99 = sphi [#allocation2], [#allocation2]
            %s100 = sphi %s1, %s1
          $region24: #{swish.1} parent=20 // loop_header_branch
            %97 = sbr.rel (%p95) target = $region28
          $region25: #{swish.1} parent=20 // loop_body
            %v101 = vld [vmem:[%s99] sm:$0xf]
            %102 = vst [vmem:[%s100] sm:$0xf] %v101
          $region26: #{swish.1} parent=20 // loop_footer
            %s98 = sadd.s32 1, %s94
          $region27: #{swish.1} parent=20 // loop_footer_branch
            %93 = sbr.rel target = $region23
          $region28: #{swish.1} parent=20 // loop_exit
            _
        $region21: #{swish.1} parent=12 // pred_fallthru
          _
      $region13: #{swish.1} parent=8 // pred_fallthru
        _
      %116 = vnop
    $region9: #{swish.1} parent=1 // pred_fallthru
      _
    // Predicated region
    $region40: #{swish.1} parent=1 // pred_check
      _
    $region41: #{swish.1} parent=1 // pred_check_branch
      %118 = sbr.rel (0) target = $region43
    $region42: #{swish.1} parent=1 // pred_region
      _
    $region43: #{swish.1} parent=1 // pred_fallthru
      _

</llo_original>
